<compile_context>
chip_gen: v7x
topology: tpu7x:2x2x1
jax: 0.10.0
libtpu: 0.0.40
codegen_flags: <defaults>
</compile_context>

<pallas_src>
import functools

import jax
import jax.numpy as jnp
from jax.experimental import pallas as pl
from jax.experimental.pallas import tpu as pltpu

_LANE = 128        # lane width: hidden/output feature dims padded to this
_SUBLANE = 8       # sublane height: batch / first in-dim alignment
_MAX_TM = 512      # max batch rows per tile (amortizes ~0.35us per-step cost)
_COMPUTE = jnp.bfloat16   # MXU-native matmul input dtype (f32 accumulation)


def _round_up(v: int, m: int) -> int:
    return (v + m - 1) // m * m


# ----------------------------------------------------------------------------
# Fused MLP kernel: all layers in one body, weights resident in VMEM.
#   refs = (x_ref, w0_ref, b0_ref, w1_ref, b1_ref, ..., o_ref)
# ----------------------------------------------------------------------------
def _fused_mlp_kernel(*refs, num_layers: int):
    x_ref = refs[0]
    o_ref = refs[-1]
    wb = refs[1:-1]

    h = x_ref[...]                                    # f32 activation tile
    for i in range(num_layers):                       # static unroll over layers
        w = wb[2 * i][...]                            # bf16 (p_in_i, p_out_i)
        b = wb[2 * i + 1][...]                        # f32  (1, p_out_i)
        # bf16 x bf16 -> f32 accumulate on the MXU; bias-add in f32.
        h = jnp.dot(h.astype(w.dtype), w,
                    preferred_element_type=jnp.float32) + b
        if i < num_layers - 1:                        # Tanh on all but last layer
            h = jnp.tanh(h)                           # f32 elementwise (v5e-safe)
    o_ref[...] = h.astype(o_ref.dtype)


# ----------------------------------------------------------------------------
# Parameter handling
# ----------------------------------------------------------------------------
def init_mlp_params(sizes, key, dtype=jnp.float32):
    """Deterministic parameter init (mimics nn.Linear shapes, stored [in,out])."""
    params = []
    for i in range(len(sizes) - 1):
        key, kw, kb = jax.random.split(key, 3)
        fan_in = sizes[i]
        scale = 1.0 / jnp.sqrt(jnp.asarray(fan_in, dtype))
        w = jax.random.uniform(kw, (sizes[i], sizes[i + 1]), dtype,
                               minval=-scale, maxval=scale)
        b = jax.random.uniform(kb, (sizes[i + 1],), dtype,
                               minval=-scale, maxval=scale)
        params.append((w, b))
    return params


def pad_mlp_params(params, weight_dtype=_COMPUTE, bias_dtype=jnp.float32):
    """Pad/cast once at prep time.

    * Layer 0 in-dim: pad only to the 8-row sublane (no wasted K on the MXU,
      and x needs no 128-wide feature pad).
    * Hidden / output dims: pad to multiples of 128 -> lane-dense stores and
      full-width intermediate matmuls.  Zero padding is exact.
    * Weights -> bf16, biases -> f32.
    """
    padded = []
    for i, (w, b) in enumerate(params):
        din, dout = w.shape
        pin = _round_up(din, _SUBLANE) if i == 0 else _round_up(din, _LANE)
        pout = _round_up(dout, _LANE)
        wp = jnp.zeros((pin, pout), weight_dtype).at[:din, :dout].set(
            w.astype(weight_dtype))
        bp = jnp.zeros((1, pout), bias_dtype).at[0, :dout].set(
            b.astype(bias_dtype))
        padded.append((wp, bp))
    return padded


# ----------------------------------------------------------------------------
# Forward pass: single fused pallas_call over a batch-tiled (parallel) grid.
# ----------------------------------------------------------------------------
def flmr_mlp_forward(x, padded_params, out_dim):
    B, din = x.shape
    num_layers = len(padded_params)
    p_in0 = padded_params[0][0].shape[0]
    p_out = padded_params[-1][0].shape[1]

    # --- batch tiling --------------------------------------------------------
    b_pad = _round_up(B, _SUBLANE)
    if b_pad <= _SUBLANE:
        tm = b_pad                                     # one tiny tile
    elif b_pad <= 2 * _MAX_TM:
        # >= 2 grid steps so both v7x TensorCores get a share of the parallel
        # batch axis; keep the split exact (tiles divide b_pad).
        tm = b_pad // 2 if b_pad % (2 * _SUBLANE) == 0 else b_pad
    else:
        tm = _MAX_TM                                   # big batch: 512-row tiles
    grid_m = pl.cdiv(b_pad, tm)                        # ragged last tile is masked

    # Pad x only when actually needed; for aligned shapes this is a no-op and
    # adds no extra HBM pass.
    if b_pad != B or p_in0 != din:
        x_in = jnp.zeros((b_pad, p_in0), x.dtype).at[:B, :din].set(x)
    else:
        x_in = x

    flat_wb = []
    for w, b in padded_params:
        flat_wb.extend((w, b))

    # --- advisory cost estimate ----------------------------------------------
    flops = 0
    transcendentals = 0
    bytes_accessed = (x_in.size * x_in.dtype.itemsize
                      + b_pad * p_out * x.dtype.itemsize)
    for i, (w, b) in enumerate(padded_params):
        flops += 2 * b_pad * w.shape[0] * w.shape[1]
        if i < num_layers - 1:
            transcendentals += b_pad * w.shape[1]
        bytes_accessed += w.size * w.dtype.itemsize + b.size * b.dtype.itemsize

    # --- explicit VMEM budget (defaults are 16/32 MiB, far below physical) ---
    def vmem_limit(weight_buffers):
        wb_bytes = sum(w.size * w.dtype.itemsize + b.size * b.dtype.itemsize
                       for w, b in padded_params) * weight_buffers
        max_w = max(w.shape[1] for w, _ in padded_params)
        # double-buffered x/out tiles + widest f32 intermediate h tile
        act_bytes = 2 * tm * (p_in0 + p_out + max_w) * 4
        limit = int(1.5 * (wb_bytes + act_bytes)) + (4 << 20)
        return max(32 << 20, min(limit, 112 << 20))

    kernel = functools.partial(_fused_mlp_kernel, num_layers=num_layers)

    def run(single_buffer_weights):
        in_specs = [pl.BlockSpec((tm, p_in0), lambda i: (i, 0))]      # x tile
        for w, b in padded_params:
            pin_i, pout_i = w.shape
            if single_buffer_weights:
                # Constant index_map -> block never changes across grid steps;
                # one buffer suffices (halves resident weight VMEM).
                w_spec = pl.BlockSpec((pin_i, pout_i), lambda i: (0, 0),
                                      pipeline_mode=pl.Buffered(1))
                b_spec = pl.BlockSpec((1, pout_i), lambda i: (0, 0),
                                      pipeline_mode=pl.Buffered(1))
            else:
                w_spec = pl.BlockSpec((pin_i, pout_i), lambda i: (0, 0))
                b_spec = pl.BlockSpec((1, pout_i), lambda i: (0, 0))
            in_specs.extend((w_spec, b_spec))

        weight_buffers = 1 if single_buffer_weights else 2
        return pl.pallas_call(
            kernel,
            out_shape=jax.ShapeDtypeStruct((b_pad, p_out), x.dtype),
            grid_spec=pltpu.PrefetchScalarGridSpec(
                num_scalar_prefetch=0,
                grid=(grid_m,),
                in_specs=in_specs,
                out_specs=pl.BlockSpec((tm, p_out), lambda i: (i, 0)),
            ),
            compiler_params=pltpu.CompilerParams(
                dimension_semantics=("parallel",),
                vmem_limit_bytes=vmem_limit(weight_buffers),
            ),
            cost_estimate=pl.CostEstimate(
                flops=flops,
                transcendentals=transcendentals,
                bytes_accessed=bytes_accessed,
            ),
        )(x_in, *flat_wb)

    try:
        out = run(single_buffer_weights=True)
    except Exception:
        # Fallback if this jax build rejects pl.Buffered(1) on pallas_call
        # input specs; semantics are identical, only weight VMEM doubles.
        out = run(single_buffer_weights=False)

    # Strip batch/feature padding only when it exists.
    if b_pad != B or p_out != out_dim:
        out = out[:B, :out_dim]
    return out


def flmr_mlp_reference(x, params):
    """Pure-JAX f32 reference matching nn.Sequential(Linear, Tanh, ..., Linear)."""
    n = len(params)
    h = x
    for i, (w, b) in enumerate(params):
        h = h @ w + b
        if i < n - 1:
            h = jnp.tanh(h)
    return h


if __name__ == "__main__":
    # Small shapes consistent with the module: sizes=(32, 64, 48), batch=16.
    sizes = (32, 64, 48)
    batch = 16

    key = jax.random.PRNGKey(0)
    key, kx = jax.random.split(key)
    x = jax.random.normal(kx, (batch, sizes[0]), dtype=jnp.float32)

    params = init_mlp_params(sizes, key)
    padded_params = pad_mlp_params(params)   # pad/cast once (bf16 weights)

    out = flmr_mlp_forward(x, padded_params, sizes[-1])
    out = jax.block_until_ready(out)

    ref = flmr_mlp_reference(x, params)
    assert out.shape == (batch, sizes[-1])
    # bf16 MXU inputs with f32 accumulation -> looser tolerance than pure f32.
    assert jnp.allclose(out, ref, atol=3e-2, rtol=3e-2), "mismatch vs reference"

    print("KERNEL_OK")
</pallas_src>

<mosaic_0001>
module attributes {stable_mosaic.version = 11 : i64} {
  func.func @_fused_mlp_kernel(%arg0: i32, %arg1: memref<8x32xf32, #tpu.memory_space<vmem>>, %arg2: memref<32x128xbf16, #tpu.memory_space<vmem>>, %arg3: memref<1x128xf32, #tpu.memory_space<vmem>>, %arg4: memref<128x128xbf16, #tpu.memory_space<vmem>>, %arg5: memref<1x128xf32, #tpu.memory_space<vmem>>, %arg6: memref<8x128xf32, #tpu.memory_space<vmem>>) attributes {dimension_semantics = [#tpu.dimension_semantics<parallel>], iteration_bounds = array<i64: 2>, scalar_prefetch = 0 : i64, scratch_operands = 0 : i64, tpu.core_type = #tpu.core_type<tc>, window_params = [{transform_indices = @transform_0, window_bounds = array<i64: 8, 32>}, {pipeline_mode = #tpu.pipeline_mode<synchronous>, transform_indices = @transform_1, window_bounds = array<i64: 32, 128>}, {pipeline_mode = #tpu.pipeline_mode<synchronous>, transform_indices = @transform_2, window_bounds = array<i64: 1, 128>}, {pipeline_mode = #tpu.pipeline_mode<synchronous>, transform_indices = @transform_3, window_bounds = array<i64: 128, 128>}, {pipeline_mode = #tpu.pipeline_mode<synchronous>, transform_indices = @transform_4, window_bounds = array<i64: 1, 128>}, {transform_indices = @transform_5, window_bounds = array<i64: 8, 128>}]} {
    %c0 = arith.constant 0 : index
    %c0_0 = arith.constant 0 : index
    %0 = vector.load %arg1[%c0, %c0_0] : memref<8x32xf32, #tpu.memory_space<vmem>>, vector<8x32xf32>
    %c0_1 = arith.constant 0 : index
    %c0_2 = arith.constant 0 : index
    %1 = vector.load %arg2[%c0_1, %c0_2] : memref<32x128xbf16, #tpu.memory_space<vmem>>, vector<32x128xbf16>
    %c0_3 = arith.constant 0 : index
    %c0_4 = arith.constant 0 : index
    %2 = vector.load %arg3[%c0_3, %c0_4] : memref<1x128xf32, #tpu.memory_space<vmem>>, vector<1x128xf32>
    %3 = arith.truncf %0 : vector<8x32xf32> to vector<8x32xbf16>
    %cst = arith.constant dense<0.000000e+00> : vector<8x128xf32>
    %4 = tpu.matmul %3, %1, %cst {dimension_numbers = #tpu.dot_dimension_numbers<[1], [0], [0], [1], [0, 0, 1, 1], [], []>} : vector<8x32xbf16>, vector<32x128xbf16>, vector<8x128xf32> -> vector<8x128xf32>
    %5 = vector.broadcast %2 : vector<1x128xf32> to vector<8x128xf32>
    %6 = arith.addf %4, %5 : vector<8x128xf32>
    %7 = math.tanh %6 : vector<8x128xf32>
    %c0_5 = arith.constant 0 : index
    %c0_6 = arith.constant 0 : index
    %8 = vector.load %arg4[%c0_5, %c0_6] : memref<128x128xbf16, #tpu.memory_space<vmem>>, vector<128x128xbf16>
    %c0_7 = arith.constant 0 : index
    %c0_8 = arith.constant 0 : index
    %9 = vector.load %arg5[%c0_7, %c0_8] : memref<1x128xf32, #tpu.memory_space<vmem>>, vector<1x128xf32>
    %10 = arith.truncf %7 : vector<8x128xf32> to vector<8x128xbf16>
    %cst_9 = arith.constant dense<0.000000e+00> : vector<8x128xf32>
    %11 = tpu.matmul %10, %8, %cst_9 {dimension_numbers = #tpu.dot_dimension_numbers<[1], [0], [0], [1], [0, 0, 1, 1], [], []>} : vector<8x128xbf16>, vector<128x128xbf16>, vector<8x128xf32> -> vector<8x128xf32>
    %12 = vector.broadcast %9 : vector<1x128xf32> to vector<8x128xf32>
    %13 = arith.addf %11, %12 : vector<8x128xf32>
    %c0_10 = arith.constant 0 : index
    %c0_11 = arith.constant 0 : index
    %14 = vector.load %arg6[%c0_10, %c0_11] : memref<8x128xf32, #tpu.memory_space<vmem>>, vector<8x128xf32>
    tpu.vector_store %arg6[%c0_10, %c0_11], %13 {strides = array<i32>} : memref<8x128xf32, #tpu.memory_space<vmem>>, vector<8x128xf32>,
    return
  }
  func.func @transform_0(%arg0: i32) -> (i32, i32) {
    %c0_i32 = arith.constant 0 : i32
    %c0_i32_0 = arith.constant 0 : i32
    return %arg0, %c0_i32 : i32, i32
  }
  func.func @transform_1(%arg0: i32) -> (i32, i32) {
    %c0_i32 = arith.constant 0 : i32
    %c0_i32_0 = arith.constant 0 : i32
    %c0_i32_1 = arith.constant 0 : i32
    return %c0_i32, %c0_i32_0 : i32, i32
  }
  func.func @transform_2(%arg0: i32) -> (i32, i32) {
    %c0_i32 = arith.constant 0 : i32
    %c0_i32_0 = arith.constant 0 : i32
    %c0_i32_1 = arith.constant 0 : i32
    return %c0_i32, %c0_i32_0 : i32, i32
  }
  func.func @transform_3(%arg0: i32) -> (i32, i32) {
    %c0_i32 = arith.constant 0 : i32
    %c0_i32_0 = arith.constant 0 : i32
    %c0_i32_1 = arith.constant 0 : i32
    return %c0_i32, %c0_i32_0 : i32, i32
  }
  func.func @transform_4(%arg0: i32) -> (i32, i32) {
    %c0_i32 = arith.constant 0 : i32
    %c0_i32_0 = arith.constant 0 : i32
    %c0_i32_1 = arith.constant 0 : i32
    return %c0_i32, %c0_i32_0 : i32, i32
  }
  func.func @transform_5(%arg0: i32) -> (i32, i32) {
    %c0_i32 = arith.constant 0 : i32
    %c0_i32_0 = arith.constant 0 : i32
    return %arg0, %c0_i32 : i32, i32
  }
}

module attributes {stable_mosaic.version = 11 : i64} {
  func.func @_fused_mlp_kernel(%arg0: i32, %arg1: memref<8x32xf32, #tpu.memory_space<vmem>>, %arg2: memref<32x128xbf16, #tpu.memory_space<vmem>>, %arg3: memref<1x128xf32, #tpu.memory_space<vmem>>, %arg4: memref<128x128xbf16, #tpu.memory_space<vmem>>, %arg5: memref<1x128xf32, #tpu.memory_space<vmem>>, %arg6: memref<8x128xf32, #tpu.memory_space<vmem>>) attributes {dimension_semantics = [#tpu.dimension_semantics<parallel>], iteration_bounds = array<i64: 2>, scalar_prefetch = 0 : i64, scratch_operands = 0 : i64, tpu.core_type = #tpu.core_type<tc>, window_params = [{transform_indices = @transform_0, window_bounds = array<i64: 8, 32>}, {pipeline_mode = #tpu.pipeline_mode<synchronous>, transform_indices = @transform_1, window_bounds = array<i64: 32, 128>}, {pipeline_mode = #tpu.pipeline_mode<synchronous>, transform_indices = @transform_2, window_bounds = array<i64: 1, 128>}, {pipeline_mode = #tpu.pipeline_mode<synchronous>, transform_indices = @transform_3, window_bounds = array<i64: 128, 128>}, {pipeline_mode = #tpu.pipeline_mode<synchronous>, transform_indices = @transform_4, window_bounds = array<i64: 1, 128>}, {transform_indices = @transform_5, window_bounds = array<i64: 8, 128>}]} {
    %c0 = arith.constant 0 : index
    %c0_0 = arith.constant 0 : index
    %0 = vector.load %arg1[%c0, %c0_0] : memref<8x32xf32, #tpu.memory_space<vmem>>, vector<8x32xf32>
    %c0_1 = arith.constant 0 : index
    %c0_2 = arith.constant 0 : index
    %1 = vector.load %arg2[%c0_1, %c0_2] : memref<32x128xbf16, #tpu.memory_space<vmem>>, vector<32x128xbf16>
    %c0_3 = arith.constant 0 : index
    %c0_4 = arith.constant 0 : index
    %2 = vector.load %arg3[%c0_3, %c0_4] : memref<1x128xf32, #tpu.memory_space<vmem>>, vector<1x128xf32>
    %3 = arith.truncf %0 : vector<8x32xf32> to vector<8x32xbf16>
    %cst = arith.constant dense<0.000000e+00> : vector<8x128xf32>
    %4 = tpu.matmul %3, %1, %cst {dimension_numbers = #tpu.dot_dimension_numbers<[1], [0], [0], [1], [0, 0, 1, 1], [], []>} : vector<8x32xbf16>, vector<32x128xbf16>, vector<8x128xf32> -> vector<8x128xf32>
    %5 = vector.broadcast %2 : vector<1x128xf32> to vector<8x128xf32>
    %6 = arith.addf %4, %5 : vector<8x128xf32>
    %7 = math.tanh %6 : vector<8x128xf32>
    %c0_5 = arith.constant 0 : index
    %c0_6 = arith.constant 0 : index
    %8 = vector.load %arg4[%c0_5, %c0_6] : memref<128x128xbf16, #tpu.memory_space<vmem>>, vector<128x128xbf16>
    %c0_7 = arith.constant 0 : index
    %c0_8 = arith.constant 0 : index
    %9 = vector.load %arg5[%c0_7, %c0_8] : memref<1x128xf32, #tpu.memory_space<vmem>>, vector<1x128xf32>
    %10 = arith.truncf %7 : vector<8x128xf32> to vector<8x128xbf16>
    %cst_9 = arith.constant dense<0.000000e+00> : vector<8x128xf32>
    %11 = tpu.matmul %10, %8, %cst_9 {dimension_numbers = #tpu.dot_dimension_numbers<[1], [0], [0], [1], [0, 0, 1, 1], [], []>} : vector<8x128xbf16>, vector<128x128xbf16>, vector<8x128xf32> -> vector<8x128xf32>
    %12 = vector.broadcast %9 : vector<1x128xf32> to vector<8x128xf32>
    %13 = arith.addf %11, %12 : vector<8x128xf32>
    %c0_10 = arith.constant 0 : index
    %c0_11 = arith.constant 0 : index
    %14 = vector.load %arg6[%c0_10, %c0_11] : memref<8x128xf32, #tpu.memory_space<vmem>>, vector<8x128xf32>
    tpu.vector_store %arg6[%c0_10, %c0_11], %13 {strides = array<i32>} : memref<8x128xf32, #tpu.memory_space<vmem>>, vector<8x128xf32>,
    return
  }
  func.func @transform_0(%arg0: i32) -> (i32, i32) {
    %c0_i32 = arith.constant 0 : i32
    %c0_i32_0 = arith.constant 0 : i32
    return %arg0, %c0_i32 : i32, i32
  }
  func.func @transform_1(%arg0: i32) -> (i32, i32) {
    %c0_i32 = arith.constant 0 : i32
    %c0_i32_0 = arith.constant 0 : i32
    %c0_i32_1 = arith.constant 0 : i32
    return %c0_i32, %c0_i32_0 : i32, i32
  }
  func.func @transform_2(%arg0: i32) -> (i32, i32) {
    %c0_i32 = arith.constant 0 : i32
    %c0_i32_0 = arith.constant 0 : i32
    %c0_i32_1 = arith.constant 0 : i32
    return %c0_i32, %c0_i32_0 : i32, i32
  }
  func.func @transform_3(%arg0: i32) -> (i32, i32) {
    %c0_i32 = arith.constant 0 : i32
    %c0_i32_0 = arith.constant 0 : i32
    %c0_i32_1 = arith.constant 0 : i32
    return %c0_i32, %c0_i32_0 : i32, i32
  }
  func.func @transform_4(%arg0: i32) -> (i32, i32) {
    %c0_i32 = arith.constant 0 : i32
    %c0_i32_0 = arith.constant 0 : i32
    %c0_i32_1 = arith.constant 0 : i32
    return %c0_i32, %c0_i32_0 : i32, i32
  }
  func.func @transform_5(%arg0: i32) -> (i32, i32) {
    %c0_i32 = arith.constant 0 : i32
    %c0_i32_0 = arith.constant 0 : i32
    return %arg0, %c0_i32 : i32, i32
  }
}

</mosaic_0001>

<llo_original>
// kernel: tpu_custom_call.1
$region0: #{tpu_custom_call.1}
  #allocation0 [shape = 'u32[]', space=smem, size = 0x4, offset = 0x4, fixed_abs, tag = 'smem constant byte address 0x4 - core index']
  #allocation1 [shape = 'u32[144,128]{1,0:T(1,128)}', space=vmem, size = 0x12000, scoped, tag = 'internal scratch']
  %s0 = inlined_call_operand.hbm [shape: f32[16,32], index: 0, kind: input, shape index: {}]
  %s1 = inlined_call_operand.hbm [shape: bf16[32,128], index: 1, kind: input, shape index: {}]
  %s2 = inlined_call_operand.vmem [shape: f32[1,128], index: 2, kind: input, shape index: {}]
  %s3 = inlined_call_operand.hbm [shape: bf16[128,128], index: 3, kind: input, shape index: {}]
  %s4 = inlined_call_operand.vmem [shape: f32[1,128], index: 4, kind: input, shape index: {}]
  %s5 = inlined_call_operand.hbm [shape: f32[16,128], index: 5, kind: output, shape index: {}]
  %s6 = sld [smem:[#allocation0]]
  $region65: #{tpu_custom_call.1} parent=0
    _
  %s8 = ssub.s32 1, %s6
  %s9 = scalar_select 0, %s8, %s6
  $region1: #{tpu_custom_call.1} parent=0
    #allocation2 [shape = 'u8[8192]{0}', space=vmem, size = 0x2000, scoped, tag = 'input window, operand 0']
    #allocation3 [shape = 's32[2]{0}', space=sflag, size = 0x8, scoped, tag = 'scoped memory for tpu_custom_call.1']
    #allocation4 [shape = 's32[2]{0}', space=sflag, size = 0x8, scoped, tag = 'scoped memory for tpu_custom_call.1']
    #allocation5 [shape = 'u8[8192]{0}', space=vmem, size = 0x2000, scoped, tag = 'input window, operand 1, single buffered']
    #allocation6 [shape = 's32[1]{0}', space=sflag, size = 0x4, scoped, tag = 'scoped memory for tpu_custom_call.1']
    #allocation7 [shape = 'u8[32768]{0}', space=vmem, size = 0x8000, scoped, tag = 'input window, operand 3, single buffered']
    #allocation8 [shape = 'u8[8192]{0}', space=vmem, size = 0x2000, scoped, tag = 'output window, operand 0']
    %10 = vsyncpa [#allocation3], 0
    %s11 = scalar_lea.sflag [#allocation3], 1
    %12 = vsyncpa %s11, 0
    %13 = vsyncpa [#allocation6], 0
    %14 = vsyncpa [#allocation4], 0
    %s15 = scalar_lea.sflag [#allocation4], 1
    %16 = vsyncpa %s15, 0
    loop: start=0, step=1, limit=4
    $region2: #{tpu_custom_call.1} parent=1 // loop_pre_header
      _
    $region3: #{tpu_custom_call.1} parent=1 // loop_header
      %s18 = sphi 0, %s22
      %p19 = scmp.ge.s32.totalorder %s18, 4
      %s28 = sphi 0, %s30
      %s31 = sphi 0, %s28
      %s32 = sphi 0, %s31
      %s48 = sphi 0, %s32
      %s52 = sphi 0, %s52
      %s54 = sphi 0, %s52
      %s55 = sphi 0, %s54
      %s69 = sphi 0, %s55
      %s73 = sphi 0, %s73
      %s75 = sphi 0, %s73
      %s76 = sphi 0, %s75
      %s90 = sphi 0, %s76
      %s94 = sphi 0, %s94
      %s96 = sphi 0, %s94
      %s97 = sphi 0, %s96
      %s111 = sphi 0, %s97
      %s115 = sphi 0, %s115
      %s117 = sphi 0, %s115
      %s118 = sphi 0, %s117
      %s132 = sphi 0, %s118
      %s138 = sphi 0, %s140
      %s141 = sphi 0, %s138
      %s142 = sphi 0, %s141
      %s158 = sphi 0, %s142
    $region4: #{tpu_custom_call.1} parent=1 // loop_header_branch
      %21 = sbr.rel (%p19) target = $region8
    $region5: #{tpu_custom_call.1} parent=1 // loop_body
      %s23 = ssub.s32 %s18, 1
      %s24 = ssub.s32 %s18, 2
      %s25 = sadd.s32 %s18, 1
      %s26 = ssub.s32 %s18, %s25
      %p27 = scmp.eq.s32.totalorder %s26, 0
      %s29 = sadd.s32 %s28, 1
      %s30 = scalar_select %p27, %s28, %s29
      %p33 = pneg %p27
      %p34 = scmp.eq.s32.totalorder %s18, 1
      %p35 = por %p33, %p34
      %p36 = scmp.ne.s32.totalorder %s28, %s31
      %p37 = scmp.eq.s32.totalorder %s18, 0
      %p38 = por %p36, %p37
      %p39 = scmp.ne.s32.totalorder %s28, %s31
      %p40 = scmp.eq.s32.totalorder %s23, 1
      %p41 = por %p39, %p40
      %p42 = scmp.ne.s32.totalorder %s31, %s32
      %p43 = scmp.eq.s32.totalorder %s23, 0
      %p44 = por %p42, %p43
      %p45 = scmp.ne.s32.totalorder %s31, %s32
      %p46 = scmp.eq.s32.totalorder %s24, 1
      %p47 = por %p45, %p46
      %p49 = scmp.ne.s32.totalorder %s32, %s48
      %p50 = scmp.eq.s32.totalorder %s24, 0
      %p51 = por %p49, %p50
      %s53 = sadd.s32 %s52, 1
      %p56 = scmp.eq.s32.totalorder %s18, 1
      %p57 = scmp.ne.s32.totalorder %s52, %s54
      %p58 = scmp.eq.s32.totalorder %s18, 0
      %p59 = por %p57, %p58
      %p60 = scmp.ne.s32.totalorder %s52, %s54
      %p61 = scmp.eq.s32.totalorder %s23, 1
      %p62 = por %p60, %p61
      %p63 = scmp.ne.s32.totalorder %s54, %s55
      %p64 = scmp.eq.s32.totalorder %s23, 0
      %p65 = por %p63, %p64
      %p66 = scmp.ne.s32.totalorder %s54, %s55
      %p67 = scmp.eq.s32.totalorder %s24, 1
      %p68 = por %p66, %p67
      %p70 = scmp.ne.s32.totalorder %s55, %s69
      %p71 = scmp.eq.s32.totalorder %s24, 0
      %p72 = por %p70, %p71
      %s74 = sadd.s32 %s73, 1
      %p77 = scmp.eq.s32.totalorder %s18, 1
      %p78 = scmp.ne.s32.totalorder %s73, %s75
      %p79 = scmp.eq.s32.totalorder %s18, 0
      %p80 = por %p78, %p79
      %p81 = scmp.ne.s32.totalorder %s73, %s75
      %p82 = scmp.eq.s32.totalorder %s23, 1
      %p83 = por %p81, %p82
      %p84 = scmp.ne.s32.totalorder %s75, %s76
      %p85 = scmp.eq.s32.totalorder %s23, 0
      %p86 = por %p84, %p85
      %p87 = scmp.ne.s32.totalorder %s75, %s76
      %p88 = scmp.eq.s32.totalorder %s24, 1
      %p89 = por %p87, %p88
      %p91 = scmp.ne.s32.totalorder %s76, %s90
      %p92 = scmp.eq.s32.totalorder %s24, 0
      %p93 = por %p91, %p92
      %s95 = sadd.s32 %s94, 1
      %p98 = scmp.eq.s32.totalorder %s18, 1
      %p99 = scmp.ne.s32.totalorder %s94, %s96
      %p100 = scmp.eq.s32.totalorder %s18, 0
      %p101 = por %p99, %p100
      %p102 = scmp.ne.s32.totalorder %s94, %s96
      %p103 = scmp.eq.s32.totalorder %s23, 1
      %p104 = por %p102, %p103
      %p105 = scmp.ne.s32.totalorder %s96, %s97
      %p106 = scmp.eq.s32.totalorder %s23, 0
      %p107 = por %p105, %p106
      %p108 = scmp.ne.s32.totalorder %s96, %s97
      %p109 = scmp.eq.s32.totalorder %s24, 1
      %p110 = por %p108, %p109
      %p112 = scmp.ne.s32.totalorder %s97, %s111
      %p113 = scmp.eq.s32.totalorder %s24, 0
      %p114 = por %p112, %p113
      %s116 = sadd.s32 %s115, 1
      %p119 = scmp.eq.s32.totalorder %s18, 1
      %p120 = scmp.ne.s32.totalorder %s115, %s117
      %p121 = scmp.eq.s32.totalorder %s18, 0
      %p122 = por %p120, %p121
      %p123 = scmp.ne.s32.totalorder %s115, %s117
      %p124 = scmp.eq.s32.totalorder %s23, 1
      %p125 = por %p123, %p124
      %p126 = scmp.ne.s32.totalorder %s117, %s118
      %p127 = scmp.eq.s32.totalorder %s23, 0
      %p128 = por %p126, %p127
      %p129 = scmp.ne.s32.totalorder %s117, %s118
      %p130 = scmp.eq.s32.totalorder %s24, 1
      %p131 = por %p129, %p130
      %p133 = scmp.ne.s32.totalorder %s118, %s132
      %p134 = scmp.eq.s32.totalorder %s24, 0
      %p135 = por %p133, %p134
      %s136 = ssub.s32 %s18, %s25
      %p137 = scmp.eq.s32.totalorder %s136, 0
      %s139 = sadd.s32 %s138, 1
      %s140 = scalar_select %p137, %s138, %s139
      %p143 = pneg %p137
      %p144 = scmp.eq.s32.totalorder %s18, 1
      %p145 = por %p143, %p144
      %p146 = scmp.ne.s32.totalorder %s138, %s141
      %p147 = scmp.eq.s32.totalorder %s18, 0
      %p148 = por %p146, %p147
      %p149 = scmp.ne.s32.totalorder %s138, %s141
      %p150 = scmp.eq.s32.totalorder %s23, 1
      %p151 = por %p149, %p150
      %p152 = scmp.ne.s32.totalorder %s141, %s142
      %p153 = scmp.eq.s32.totalorder %s23, 0
      %p154 = por %p152, %p153
      %p155 = scmp.ne.s32.totalorder %s141, %s142
      %p156 = scmp.eq.s32.totalorder %s24, 1
      %p157 = por %p155, %p156
      %p159 = scmp.ne.s32.totalorder %s142, %s158
      %p160 = scmp.eq.s32.totalorder %s24, 0
      %p161 = por %p159, %p160
      %p162 = scmp.le.s32.totalorder 1, %s18
      %p163 = scmp.lt.s32.totalorder %s18, 3
      %p164 = pnand %p162, %p163
      %p165 = pneg %p164
      // Predicated region
      $region9: #{tpu_custom_call.1} parent=5 // pred_check
        _
      $region10: #{tpu_custom_call.1} parent=5 // pred_check_branch
        %167 = sbr.rel (%p164) target = $region12
      $region11: #{tpu_custom_call.1} parent=5 // pred_region
        %s168 = ssub.s32 %s18, 1
        // Predicated region
        $region13: #{tpu_custom_call.1} parent=11 // pred_check
          %p169 = pneg %p65
        $region14: #{tpu_custom_call.1} parent=11 // pred_check_branch
          %171 = sbr.rel (%p169) target = $region16
        $region15: #{tpu_custom_call.1} parent=11 // pred_region
          %s173 = ssub.s32 256, 256
          %174 = vsyncadd [#allocation6], %s173
          %s175 = sshll.u32 [#allocation5], 4
          %s176 = int_to_ptr.vmem [resolvable:$true] %s175
          %181 = dma.hbm_to_vmem [thread:$0]  %s1, 256, %s176, [#allocation6], 64, 64, 4
        $region16: #{tpu_custom_call.1} parent=11 // pred_fallthru
          _
        // Predicated region
        $region17: #{tpu_custom_call.1} parent=11 // pred_check
          %p182 = pneg %p86
        $region18: #{tpu_custom_call.1} parent=11 // pred_check_branch
          %184 = sbr.rel (%p182) target = $region20
        $region19: #{tpu_custom_call.1} parent=11 // pred_region
          _
        $region20: #{tpu_custom_call.1} parent=11 // pred_fallthru
          _
        // Predicated region
        $region21: #{tpu_custom_call.1} parent=11 // pred_check
          %p185 = pneg %p107
        $region22: #{tpu_custom_call.1} parent=11 // pred_check_branch
          %187 = sbr.rel (%p185) target = $region24
        $region23: #{tpu_custom_call.1} parent=11 // pred_region
          %s189 = ssub.s32 1024, 1024
          %190 = vsyncadd [#allocation6], %s189
          %s191 = sshll.u32 [#allocation7], 4
          %s192 = int_to_ptr.vmem [resolvable:$true] %s191
          %197 = dma.hbm_to_vmem [thread:$0]  %s3, 1024, %s192, [#allocation6], 64, 64, 4
        $region24: #{tpu_custom_call.1} parent=11 // pred_fallthru
          _
        // Predicated region
        $region25: #{tpu_custom_call.1} parent=11 // pred_check
          %p198 = pneg %p128
        $region26: #{tpu_custom_call.1} parent=11 // pred_check_branch
          %200 = sbr.rel (%p198) target = $region28
        $region27: #{tpu_custom_call.1} parent=11 // pred_region
          _
        $region28: #{tpu_custom_call.1} parent=11 // pred_fallthru
          _
      $region12: #{tpu_custom_call.1} parent=5 // pred_fallthru
        _
      %p201 = scmp.lt.s32.totalorder %s18, 2
      // Predicated region
      $region29: #{tpu_custom_call.1} parent=5 // pred_check
        %p202 = pneg %p201
      $region30: #{tpu_custom_call.1} parent=5 // pred_check_branch
        %204 = sbr.rel (%p202) target = $region32
      $region31: #{tpu_custom_call.1} parent=5 // pred_region
        // Predicated region
        $region33: #{tpu_custom_call.1} parent=31 // pred_check
          %p205 = pneg %p38
        $region34: #{tpu_custom_call.1} parent=31 // pred_check_branch
          %207 = sbr.rel (%p205) target = $region36
        $region35: #{tpu_custom_call.1} parent=31 // pred_region
          %s208 = sand.u32 %s28, 1
          %s209 = scalar_lea.sflag [#allocation3], %s208
          %s210 = sand.u32 %s28, 1
          %s211 = smul.addr %s210, 8
          %s212 = scalar_lea.vmem [#allocation2], %s211
          %s214 = ssub.s32 128, 128
          %215 = vsyncadd %s209, %s214
          %s216 = smul.addr %s18, 128
          %s217 = scalar_lea.hbm %s0, %s216
          %s219 = sshll.u32 %s212, 4
          %s220 = int_to_ptr.vmem [resolvable:$true] %s219
          %222 = dma.hbm_to_vmem [thread:$0]  %s217, 128, %s220, %s209
        $region36: #{tpu_custom_call.1} parent=31 // pred_fallthru
          _
      $region32: #{tpu_custom_call.1} parent=5 // pred_fallthru
        _
      %p223 = scmp.le.s32.totalorder 1, %s18
      %p224 = scmp.lt.s32.totalorder %s18, 3
      %p225 = pnand %p223, %p224
      %p226 = pneg %p225
      // Predicated region
      $region37: #{tpu_custom_call.1} parent=5 // pred_check
        _
      $region38: #{tpu_custom_call.1} parent=5 // pred_check_branch
        %228 = sbr.rel (%p225) target = $region40
      $region39: #{tpu_custom_call.1} parent=5 // pred_region
        %s229 = ssub.s32 %s18, 1
        %s230 = sand.u32 %s31, 1
        %s231 = scalar_lea.sflag [#allocation3], %s230
        %s232 = sand.u32 %s31, 1
        %s233 = smul.addr %s232, 8
        %s234 = scalar_lea.vmem [#allocation2], %s233
        // Predicated region
        $region41: #{tpu_custom_call.1} parent=39 // pred_check
          %p235 = pneg %p44
        $region42: #{tpu_custom_call.1} parent=39 // pred_check_branch
          %237 = sbr.rel (%p235) target = $region44
        $region43: #{tpu_custom_call.1} parent=39 // pred_region
          %238 = dma.done %s231, 128
        $region44: #{tpu_custom_call.1} parent=39 // pred_fallthru
          _
        // Predicated region
        $region45: #{tpu_custom_call.1} parent=39 // pred_check
          %p239 = pneg %p65
        $region46: #{tpu_custom_call.1} parent=39 // pred_check_branch
          %241 = sbr.rel (%p239) target = $region48
        $region47: #{tpu_custom_call.1} parent=39 // pred_region
          %242 = dma.done [#allocation6], 256
        $region48: #{tpu_custom_call.1} parent=39 // pred_fallthru
          _
        // Predicated region
        $region49: #{tpu_custom_call.1} parent=39 // pred_check
          %p243 = pneg %p107
        $region50: #{tpu_custom_call.1} parent=39 // pred_check_branch
          %245 = sbr.rel (%p243) target = $region52
        $region51: #{tpu_custom_call.1} parent=39 // pred_region
          %246 = dma.done [#allocation6], 1024
        $region52: #{tpu_custom_call.1} parent=39 // pred_fallthru
          _
        %s247 = sand.u32 %s31, 1
        %s248 = scalar_lea.sflag [#allocation3], %s247
        %s249 = sand.u32 %s31, 1
        %s250 = smul.addr %s249, 8
        %s251 = scalar_lea.vmem [#allocation2], %s250
        %p252 = pneg %p44
        %p253 = pneg %p41
        %p254 = pneg %p65
        %p255 = pneg %p62
        %p256 = pneg %p86
        %p257 = pneg %p83
        %p258 = pneg %p107
        %p259 = pneg %p104
        %p260 = pneg %p128
        %p261 = pneg %p125
        %p262 = pneg %p154
        %p263 = pneg %p151
        %s264 = sand.u32 %s141, 1
        %s265 = scalar_lea.sflag [#allocation4], %s264
        %s266 = sand.u32 %s141, 1
        %s267 = smul.addr %s266, 8
        %s268 = scalar_lea.vmem [#allocation8], %s267
        %v270 = vld [vmem:[%s234] sm:$0xff]
        %v271 = vld [vmem:[#allocation5] sm:$0xf]
        %v272 = vld [vmem:[#allocation5 + $0x4] sm:$0xf]
        %v273 = vld [vmem:[#allocation5 + $0x8] sm:$0xf]
        %v274 = vld [vmem:[#allocation5 + $0xc] sm:$0xf]
        %v275 = vld [vmem:[%s2] sm:$0x1]
        %v276 = vpack.c.bf16 %v270, %v270
        %v278 = vlaneseq
        %v279 = vshrl.u32 %v278, 7
        %v280 = vsub.s32 0, %v279
        %v281 = vrot.slane %v275, %v280
        %v287 = vunpack.c.l.b16 %v271
        %v288 = vunpack.c.l.b16 %v272
        %v289 = vunpack.c.l.b16 %v273
        %v290 = vunpack.c.l.b16 %v274
        %v291 = vpack.c.b16 %v288, %v287
        %v292 = vpack.c.b16 %v290, %v289
        %vm295 = vcmask 261120
        %v297 = vsel %vm295, %v276, 0
        %299 = vmatprep.subr.bf16.mxu0 0
        %300 = vmatpush1.bf16.msra.mxu0 %v291
        %301 = vmatprep.subr.bf16.mxu0 0
        %302 = vmatpush1.bf16.msra.mxu0 %v292
        %303 = vmatprep.subr.bf16.mxu0 0
        %304 = vmatpush1.bf16.msra.mxu0 0
        %305 = vmatprep.subr.bf16.mxu0 0
        %306 = vmatpush1.bf16.msra.mxu0 0
        %307 = vmatprep.subr.bf16.mxu0 0
        %308 = vmatpush1.bf16.msra.mxu0 0
        %309 = vmatprep.subr.bf16.mxu0 0
        %310 = vmatpush1.bf16.msra.mxu0 0
        %311 = vmatprep.subr.bf16.mxu0 0
        %312 = vmatpush1.bf16.msra.mxu0 0
        %313 = vmatprep.subr.bf16.mxu0 0
        %314 = vmatpush1.bf16.msra.mxu0 0
        %315 = vmatprep.subr.bf16.mxu0 0
        %316 = vmatpush1.bf16.msra.mxu0 0
        %317 = vmatprep.subr.bf16.mxu0 0
        %318 = vmatpush1.bf16.msra.mxu0 0
        %319 = vmatprep.subr.bf16.mxu0 0
        %320 = vmatpush1.bf16.msra.mxu0 0
        %321 = vmatprep.subr.bf16.mxu0 0
        %322 = vmatpush1.bf16.msra.mxu0 0
        %323 = vmatprep.subr.bf16.mxu0 0
        %324 = vmatpush1.bf16.msra.mxu0 0
        %325 = vmatprep.subr.bf16.mxu0 0
        %326 = vmatpush1.bf16.msra.mxu0 0
        %327 = vmatprep.subr.bf16.mxu0 0
        %328 = vmatpush1.bf16.msra.mxu0 0
        %329 = vmatprep.subr.bf16.mxu0 0
        %330 = vmatpush1.bf16.msra.mxu0 0
        %331 = vmatprep.mubr.bf16.mxu0 0
        %332 = vmatmul.mubr.bf16.gmra.mrb[0].mxu0 %v297
        %v333 = vpop.f32.mrb[0].mxu0
        %v334 = vadd.f32 %v281, %v333
        %v335 = vpop.f32.mrb[0].mxu0
        %v336 = vpop.f32.mrb[0].mxu0
        %v337 = vpop.f32.mrb[0].mxu0
        %338 = vdwg.mxu0
        %v339 = vtanh.pop %v334
        %v340 = vld [vmem:[#allocation7] sm:$0xf]
        %v341 = vld [vmem:[#allocation7 + $0x4] sm:$0xf]
        %v342 = vld [vmem:[#allocation7 + $0x8] sm:$0xf]
        %v343 = vld [vmem:[#allocation7 + $0xc] sm:$0xf]
        %v344 = vld [vmem:[#allocation7 + $0x10] sm:$0xf]
        %v345 = vld [vmem:[#allocation7 + $0x14] sm:$0xf]
        %v346 = vld [vmem:[#allocation7 + $0x18] sm:$0xf]
        %v347 = vld [vmem:[#allocation7 + $0x1c] sm:$0xf]
        %v348 = vld [vmem:[#allocation7 + $0x20] sm:$0xf]
        %v349 = vld [vmem:[#allocation7 + $0x24] sm:$0xf]
        %v350 = vld [vmem:[#allocation7 + $0x28] sm:$0xf]
        %v351 = vld [vmem:[#allocation7 + $0x2c] sm:$0xf]
        %v352 = vld [vmem:[#allocation7 + $0x30] sm:$0xf]
        %v353 = vld [vmem:[#allocation7 + $0x34] sm:$0xf]
        %v354 = vld [vmem:[#allocation7 + $0x38] sm:$0xf]
        %v355 = vld [vmem:[#allocation7 + $0x3c] sm:$0xf]
        %v356 = vld [vmem:[%s4] sm:$0x1]
        %v357 = vpack.c.bf16 %v339, %v339
        %v359 = vlaneseq
        %v360 = vshrl.u32 %v359, 7
        %v361 = vsub.s32 0, %v360
        %v362 = vrot.slane %v356, %v361
        %v380 = vunpack.c.l.b16 %v340
        %v381 = vunpack.c.l.b16 %v341
        %v382 = vunpack.c.l.b16 %v342
        %v383 = vunpack.c.l.b16 %v343
        %v384 = vunpack.c.l.b16 %v344
        %v385 = vunpack.c.l.b16 %v345
        %v386 = vunpack.c.l.b16 %v346
        %v387 = vunpack.c.l.b16 %v347
        %v388 = vunpack.c.l.b16 %v348
        %v389 = vunpack.c.l.b16 %v349
        %v390 = vunpack.c.l.b16 %v350
        %v391 = vunpack.c.l.b16 %v351
        %v392 = vunpack.c.l.b16 %v352
        %v393 = vunpack.c.l.b16 %v353
        %v394 = vunpack.c.l.b16 %v354
        %v395 = vunpack.c.l.b16 %v355
        %v396 = vpack.c.b16 %v381, %v380
        %v397 = vpack.c.b16 %v383, %v382
        %v398 = vpack.c.b16 %v385, %v384
        %v399 = vpack.c.b16 %v387, %v386
        %v400 = vpack.c.b16 %v389, %v388
        %v401 = vpack.c.b16 %v391, %v390
        %v402 = vpack.c.b16 %v393, %v392
        %v403 = vpack.c.b16 %v395, %v394
        %412 = vmatprep.subr.bf16.mxu0 0
        %413 = vmatpush1.bf16.msra.mxu0 %v396
        %414 = vmatprep.subr.bf16.mxu0 0
        %415 = vmatpush1.bf16.msra.mxu0 %v397
        %416 = vmatprep.subr.bf16.mxu0 0
        %417 = vmatpush1.bf16.msra.mxu0 %v398
        %418 = vmatprep.subr.bf16.mxu0 0
        %419 = vmatpush1.bf16.msra.mxu0 %v399
        %420 = vmatprep.subr.bf16.mxu0 0
        %421 = vmatpush1.bf16.msra.mxu0 %v400
        %422 = vmatprep.subr.bf16.mxu0 0
        %423 = vmatpush1.bf16.msra.mxu0 %v401
        %424 = vmatprep.subr.bf16.mxu0 0
        %425 = vmatpush1.bf16.msra.mxu0 %v402
        %426 = vmatprep.subr.bf16.mxu0 0
        %427 = vmatpush1.bf16.msra.mxu0 %v403
        %428 = vmatprep.subr.bf16.mxu0 0
        %429 = vmatpush1.bf16.msra.mxu0 0
        %430 = vmatprep.subr.bf16.mxu0 0
        %431 = vmatpush1.bf16.msra.mxu0 0
        %432 = vmatprep.subr.bf16.mxu0 0
        %433 = vmatpush1.bf16.msra.mxu0 0
        %434 = vmatprep.subr.bf16.mxu0 0
        %435 = vmatpush1.bf16.msra.mxu0 0
        %436 = vmatprep.subr.bf16.mxu0 0
        %437 = vmatpush1.bf16.msra.mxu0 0
        %438 = vmatprep.subr.bf16.mxu0 0
        %439 = vmatpush1.bf16.msra.mxu0 0
        %440 = vmatprep.subr.bf16.mxu0 0
        %441 = vmatpush1.bf16.msra.mxu0 0
        %442 = vmatprep.subr.bf16.mxu0 0
        %443 = vmatpush1.bf16.msra.mxu0 0
        %444 = vmatprep.mubr.bf16.mxu0 0
        %445 = vmatmul.mubr.bf16.gmra.mrb[0].mxu0 %v357
        %v446 = vpop.f32.mrb[0].mxu0
        %v447 = vadd.f32 %v362, %v446
        %v448 = vpop.f32.mrb[0].mxu0
        %v449 = vpop.f32.mrb[0].mxu0
        %v450 = vpop.f32.mrb[0].mxu0
        %451 = vdwg.mxu0
        %452 = vst [vmem:[%s268] sm:$0xff] %v447
        %s453 = sand.u32 %s141, 1
        %s454 = scalar_lea.sflag [#allocation4], %s453
        %s455 = sand.u32 %s141, 1
        %s456 = smul.addr %s455, 8
        %s457 = scalar_lea.vmem [#allocation8], %s456
        // Predicated region
        $region53: #{tpu_custom_call.1} parent=39 // pred_check
          %p458 = pneg %p151
        $region54: #{tpu_custom_call.1} parent=39 // pred_check_branch
          %460 = sbr.rel (%p458) target = $region56
        $region55: #{tpu_custom_call.1} parent=39 // pred_region
          %s462 = ssub.s32 128, 128
          %463 = vsyncadd %s454, %s462
          %s464 = smul.addr %s23, 128
          %s465 = scalar_lea.hbm %s5, %s464
          %s467 = sshll.u32 %s457, 4
          %s468 = int_to_ptr.vmem [resolvable:$true] %s467
          %470 = dma.vmem_to_hbm [thread:$0]  %s468, 128, %s465, %s454
        $region56: #{tpu_custom_call.1} parent=39 // pred_fallthru
          _
      $region40: #{tpu_custom_call.1} parent=5 // pred_fallthru
        _
      %p471 = scmp.le.s32.totalorder 2, %s18
      // Predicated region
      $region57: #{tpu_custom_call.1} parent=5 // pred_check
        %p472 = pneg %p471
      $region58: #{tpu_custom_call.1} parent=5 // pred_check_branch
        %474 = sbr.rel (%p472) target = $region60
      $region59: #{tpu_custom_call.1} parent=5 // pred_region
        %s475 = ssub.s32 %s18, 2
        // Predicated region
        $region61: #{tpu_custom_call.1} parent=59 // pred_check
          %p476 = pneg %p157
        $region62: #{tpu_custom_call.1} parent=59 // pred_check_branch
          %478 = sbr.rel (%p476) target = $region64
        $region63: #{tpu_custom_call.1} parent=59 // pred_region
          %s479 = sand.u32 %s142, 1
          %s480 = scalar_lea.sflag [#allocation4], %s479
          %s481 = sand.u32 %s142, 1
          %s482 = smul.addr %s481, 8
          %s483 = scalar_lea.vmem [#allocation8], %s482
          %484 = dma.done %s480, 128
        $region64: #{tpu_custom_call.1} parent=59 // pred_fallthru
          _
      $region60: #{tpu_custom_call.1} parent=5 // pred_fallthru
        _
    $region6: #{tpu_custom_call.1} parent=1 // loop_footer
      %s22 = sadd.s32 1, %s18
    $region7: #{tpu_custom_call.1} parent=1 // loop_footer_branch
      %17 = sbr.rel target = $region3
    $region8: #{tpu_custom_call.1} parent=1 // loop_exit
      _
    %485 = vsyncpa [#allocation3], 1
    %s486 = scalar_lea.sflag [#allocation3], 1
    %487 = vsyncpa %s486, 1
    %488 = vsyncpa [#allocation6], 1
    %489 = vsyncpa [#allocation4], 1
    %s490 = scalar_lea.sflag [#allocation4], 1
    %491 = vsyncpa %s490, 1

// kernel: tpu_custom_call.1
$region0: #{tpu_custom_call.1}
  #allocation0 [shape = 'u32[]', space=smem, size = 0x4, offset = 0x4, fixed_abs, tag = 'smem constant byte address 0x4 - core index']
  #allocation1 [shape = 'u32[144,128]{1,0:T(1,128)}', space=vmem, size = 0x12000, scoped, tag = 'internal scratch']
  %s0 = inlined_call_operand.hbm [shape: f32[16,32], index: 0, kind: input, shape index: {}]
  %s1 = inlined_call_operand.hbm [shape: bf16[32,128], index: 1, kind: input, shape index: {}]
  %s2 = inlined_call_operand.vmem [shape: f32[1,128], index: 2, kind: input, shape index: {}]
  %s3 = inlined_call_operand.hbm [shape: bf16[128,128], index: 3, kind: input, shape index: {}]
  %s4 = inlined_call_operand.vmem [shape: f32[1,128], index: 4, kind: input, shape index: {}]
  %s5 = inlined_call_operand.hbm [shape: f32[16,128], index: 5, kind: output, shape index: {}]
  %s6 = sld [smem:[#allocation0]]
  $region65: #{tpu_custom_call.1} parent=0
    _
  %s8 = ssub.s32 1, %s6
  %s9 = scalar_select 0, %s8, %s6
  $region1: #{tpu_custom_call.1} parent=0
    #allocation2 [shape = 'u8[8192]{0}', space=vmem, size = 0x2000, scoped, tag = 'input window, operand 0']
    #allocation3 [shape = 's32[2]{0}', space=sflag, size = 0x8, scoped, tag = 'scoped memory for tpu_custom_call.1']
    #allocation4 [shape = 's32[2]{0}', space=sflag, size = 0x8, scoped, tag = 'scoped memory for tpu_custom_call.1']
    #allocation5 [shape = 'u8[8192]{0}', space=vmem, size = 0x2000, scoped, tag = 'input window, operand 1, single buffered']
    #allocation6 [shape = 's32[1]{0}', space=sflag, size = 0x4, scoped, tag = 'scoped memory for tpu_custom_call.1']
    #allocation7 [shape = 'u8[32768]{0}', space=vmem, size = 0x8000, scoped, tag = 'input window, operand 3, single buffered']
    #allocation8 [shape = 'u8[8192]{0}', space=vmem, size = 0x2000, scoped, tag = 'output window, operand 0']
    %10 = vsyncpa [#allocation3], 0
    %s11 = scalar_lea.sflag [#allocation3], 1
    %12 = vsyncpa %s11, 0
    %13 = vsyncpa [#allocation6], 0
    %14 = vsyncpa [#allocation4], 0
    %s15 = scalar_lea.sflag [#allocation4], 1
    %16 = vsyncpa %s15, 0
    loop: start=0, step=1, limit=4
    $region2: #{tpu_custom_call.1} parent=1 // loop_pre_header
      _
    $region3: #{tpu_custom_call.1} parent=1 // loop_header
      %s18 = sphi 0, %s22
      %p19 = scmp.ge.s32.totalorder %s18, 4
      %s28 = sphi 0, %s30
      %s31 = sphi 0, %s28
      %s32 = sphi 0, %s31
      %s48 = sphi 0, %s32
      %s52 = sphi 0, %s52
      %s54 = sphi 0, %s52
      %s55 = sphi 0, %s54
      %s69 = sphi 0, %s55
      %s73 = sphi 0, %s73
      %s75 = sphi 0, %s73
      %s76 = sphi 0, %s75
      %s90 = sphi 0, %s76
      %s94 = sphi 0, %s94
      %s96 = sphi 0, %s94
      %s97 = sphi 0, %s96
      %s111 = sphi 0, %s97
      %s115 = sphi 0, %s115
      %s117 = sphi 0, %s115
      %s118 = sphi 0, %s117
      %s132 = sphi 0, %s118
      %s138 = sphi 0, %s140
      %s141 = sphi 0, %s138
      %s142 = sphi 0, %s141
      %s158 = sphi 0, %s142
    $region4: #{tpu_custom_call.1} parent=1 // loop_header_branch
      %21 = sbr.rel (%p19) target = $region8
    $region5: #{tpu_custom_call.1} parent=1 // loop_body
      %s23 = ssub.s32 %s18, 1
      %s24 = ssub.s32 %s18, 2
      %s25 = sadd.s32 %s18, 1
      %s26 = ssub.s32 %s18, %s25
      %p27 = scmp.eq.s32.totalorder %s26, 0
      %s29 = sadd.s32 %s28, 1
      %s30 = scalar_select %p27, %s28, %s29
      %p33 = pneg %p27
      %p34 = scmp.eq.s32.totalorder %s18, 1
      %p35 = por %p33, %p34
      %p36 = scmp.ne.s32.totalorder %s28, %s31
      %p37 = scmp.eq.s32.totalorder %s18, 0
      %p38 = por %p36, %p37
      %p39 = scmp.ne.s32.totalorder %s28, %s31
      %p40 = scmp.eq.s32.totalorder %s23, 1
      %p41 = por %p39, %p40
      %p42 = scmp.ne.s32.totalorder %s31, %s32
      %p43 = scmp.eq.s32.totalorder %s23, 0
      %p44 = por %p42, %p43
      %p45 = scmp.ne.s32.totalorder %s31, %s32
      %p46 = scmp.eq.s32.totalorder %s24, 1
      %p47 = por %p45, %p46
      %p49 = scmp.ne.s32.totalorder %s32, %s48
      %p50 = scmp.eq.s32.totalorder %s24, 0
      %p51 = por %p49, %p50
      %s53 = sadd.s32 %s52, 1
      %p56 = scmp.eq.s32.totalorder %s18, 1
      %p57 = scmp.ne.s32.totalorder %s52, %s54
      %p58 = scmp.eq.s32.totalorder %s18, 0
      %p59 = por %p57, %p58
      %p60 = scmp.ne.s32.totalorder %s52, %s54
      %p61 = scmp.eq.s32.totalorder %s23, 1
      %p62 = por %p60, %p61
      %p63 = scmp.ne.s32.totalorder %s54, %s55
      %p64 = scmp.eq.s32.totalorder %s23, 0
      %p65 = por %p63, %p64
      %p66 = scmp.ne.s32.totalorder %s54, %s55
      %p67 = scmp.eq.s32.totalorder %s24, 1
      %p68 = por %p66, %p67
      %p70 = scmp.ne.s32.totalorder %s55, %s69
      %p71 = scmp.eq.s32.totalorder %s24, 0
      %p72 = por %p70, %p71
      %s74 = sadd.s32 %s73, 1
      %p77 = scmp.eq.s32.totalorder %s18, 1
      %p78 = scmp.ne.s32.totalorder %s73, %s75
      %p79 = scmp.eq.s32.totalorder %s18, 0
      %p80 = por %p78, %p79
      %p81 = scmp.ne.s32.totalorder %s73, %s75
      %p82 = scmp.eq.s32.totalorder %s23, 1
      %p83 = por %p81, %p82
      %p84 = scmp.ne.s32.totalorder %s75, %s76
      %p85 = scmp.eq.s32.totalorder %s23, 0
      %p86 = por %p84, %p85
      %p87 = scmp.ne.s32.totalorder %s75, %s76
      %p88 = scmp.eq.s32.totalorder %s24, 1
      %p89 = por %p87, %p88
      %p91 = scmp.ne.s32.totalorder %s76, %s90
      %p92 = scmp.eq.s32.totalorder %s24, 0
      %p93 = por %p91, %p92
      %s95 = sadd.s32 %s94, 1
      %p98 = scmp.eq.s32.totalorder %s18, 1
      %p99 = scmp.ne.s32.totalorder %s94, %s96
      %p100 = scmp.eq.s32.totalorder %s18, 0
      %p101 = por %p99, %p100
      %p102 = scmp.ne.s32.totalorder %s94, %s96
      %p103 = scmp.eq.s32.totalorder %s23, 1
      %p104 = por %p102, %p103
      %p105 = scmp.ne.s32.totalorder %s96, %s97
      %p106 = scmp.eq.s32.totalorder %s23, 0
      %p107 = por %p105, %p106
      %p108 = scmp.ne.s32.totalorder %s96, %s97
      %p109 = scmp.eq.s32.totalorder %s24, 1
      %p110 = por %p108, %p109
      %p112 = scmp.ne.s32.totalorder %s97, %s111
      %p113 = scmp.eq.s32.totalorder %s24, 0
      %p114 = por %p112, %p113
      %s116 = sadd.s32 %s115, 1
      %p119 = scmp.eq.s32.totalorder %s18, 1
      %p120 = scmp.ne.s32.totalorder %s115, %s117
      %p121 = scmp.eq.s32.totalorder %s18, 0
      %p122 = por %p120, %p121
      %p123 = scmp.ne.s32.totalorder %s115, %s117
      %p124 = scmp.eq.s32.totalorder %s23, 1
      %p125 = por %p123, %p124
      %p126 = scmp.ne.s32.totalorder %s117, %s118
      %p127 = scmp.eq.s32.totalorder %s23, 0
      %p128 = por %p126, %p127
      %p129 = scmp.ne.s32.totalorder %s117, %s118
      %p130 = scmp.eq.s32.totalorder %s24, 1
      %p131 = por %p129, %p130
      %p133 = scmp.ne.s32.totalorder %s118, %s132
      %p134 = scmp.eq.s32.totalorder %s24, 0
      %p135 = por %p133, %p134
      %s136 = ssub.s32 %s18, %s25
      %p137 = scmp.eq.s32.totalorder %s136, 0
      %s139 = sadd.s32 %s138, 1
      %s140 = scalar_select %p137, %s138, %s139
      %p143 = pneg %p137
      %p144 = scmp.eq.s32.totalorder %s18, 1
      %p145 = por %p143, %p144
      %p146 = scmp.ne.s32.totalorder %s138, %s141
      %p147 = scmp.eq.s32.totalorder %s18, 0
      %p148 = por %p146, %p147
      %p149 = scmp.ne.s32.totalorder %s138, %s141
      %p150 = scmp.eq.s32.totalorder %s23, 1
      %p151 = por %p149, %p150
      %p152 = scmp.ne.s32.totalorder %s141, %s142
      %p153 = scmp.eq.s32.totalorder %s23, 0
      %p154 = por %p152, %p153
      %p155 = scmp.ne.s32.totalorder %s141, %s142
      %p156 = scmp.eq.s32.totalorder %s24, 1
      %p157 = por %p155, %p156
      %p159 = scmp.ne.s32.totalorder %s142, %s158
      %p160 = scmp.eq.s32.totalorder %s24, 0
      %p161 = por %p159, %p160
      %p162 = scmp.le.s32.totalorder 1, %s18
      %p163 = scmp.lt.s32.totalorder %s18, 3
      %p164 = pnand %p162, %p163
      %p165 = pneg %p164
      // Predicated region
      $region9: #{tpu_custom_call.1} parent=5 // pred_check
        _
      $region10: #{tpu_custom_call.1} parent=5 // pred_check_branch
        %167 = sbr.rel (%p164) target = $region12
      $region11: #{tpu_custom_call.1} parent=5 // pred_region
        %s168 = ssub.s32 %s18, 1
        // Predicated region
        $region13: #{tpu_custom_call.1} parent=11 // pred_check
          %p169 = pneg %p65
        $region14: #{tpu_custom_call.1} parent=11 // pred_check_branch
          %171 = sbr.rel (%p169) target = $region16
        $region15: #{tpu_custom_call.1} parent=11 // pred_region
          %s173 = ssub.s32 256, 256
          %174 = vsyncadd [#allocation6], %s173
          %s175 = sshll.u32 [#allocation5], 4
          %s176 = int_to_ptr.vmem [resolvable:$true] %s175
          %181 = dma.hbm_to_vmem [thread:$0]  %s1, 256, %s176, [#allocation6], 64, 64, 4
        $region16: #{tpu_custom_call.1} parent=11 // pred_fallthru
          _
        // Predicated region
        $region17: #{tpu_custom_call.1} parent=11 // pred_check
          %p182 = pneg %p86
        $region18: #{tpu_custom_call.1} parent=11 // pred_check_branch
          %184 = sbr.rel (%p182) target = $region20
        $region19: #{tpu_custom_call.1} parent=11 // pred_region
          _
        $region20: #{tpu_custom_call.1} parent=11 // pred_fallthru
          _
        // Predicated region
        $region21: #{tpu_custom_call.1} parent=11 // pred_check
          %p185 = pneg %p107
        $region22: #{tpu_custom_call.1} parent=11 // pred_check_branch
          %187 = sbr.rel (%p185) target = $region24
        $region23: #{tpu_custom_call.1} parent=11 // pred_region
          %s189 = ssub.s32 1024, 1024
          %190 = vsyncadd [#allocation6], %s189
          %s191 = sshll.u32 [#allocation7], 4
          %s192 = int_to_ptr.vmem [resolvable:$true] %s191
          %197 = dma.hbm_to_vmem [thread:$0]  %s3, 1024, %s192, [#allocation6], 64, 64, 4
        $region24: #{tpu_custom_call.1} parent=11 // pred_fallthru
          _
        // Predicated region
        $region25: #{tpu_custom_call.1} parent=11 // pred_check
          %p198 = pneg %p128
        $region26: #{tpu_custom_call.1} parent=11 // pred_check_branch
          %200 = sbr.rel (%p198) target = $region28
        $region27: #{tpu_custom_call.1} parent=11 // pred_region
          _
        $region28: #{tpu_custom_call.1} parent=11 // pred_fallthru
          _
      $region12: #{tpu_custom_call.1} parent=5 // pred_fallthru
        _
      %p201 = scmp.lt.s32.totalorder %s18, 2
      // Predicated region
      $region29: #{tpu_custom_call.1} parent=5 // pred_check
        %p202 = pneg %p201
      $region30: #{tpu_custom_call.1} parent=5 // pred_check_branch
        %204 = sbr.rel (%p202) target = $region32
      $region31: #{tpu_custom_call.1} parent=5 // pred_region
        // Predicated region
        $region33: #{tpu_custom_call.1} parent=31 // pred_check
          %p205 = pneg %p38
        $region34: #{tpu_custom_call.1} parent=31 // pred_check_branch
          %207 = sbr.rel (%p205) target = $region36
        $region35: #{tpu_custom_call.1} parent=31 // pred_region
          %s208 = sand.u32 %s28, 1
          %s209 = scalar_lea.sflag [#allocation3], %s208
          %s210 = sand.u32 %s28, 1
          %s211 = smul.addr %s210, 8
          %s212 = scalar_lea.vmem [#allocation2], %s211
          %s214 = ssub.s32 128, 128
          %215 = vsyncadd %s209, %s214
          %s216 = smul.addr %s18, 128
          %s217 = scalar_lea.hbm %s0, %s216
          %s219 = sshll.u32 %s212, 4
          %s220 = int_to_ptr.vmem [resolvable:$true] %s219
          %222 = dma.hbm_to_vmem [thread:$0]  %s217, 128, %s220, %s209
        $region36: #{tpu_custom_call.1} parent=31 // pred_fallthru
          _
      $region32: #{tpu_custom_call.1} parent=5 // pred_fallthru
        _
      %p223 = scmp.le.s32.totalorder 1, %s18
      %p224 = scmp.lt.s32.totalorder %s18, 3
      %p225 = pnand %p223, %p224
      %p226 = pneg %p225
      // Predicated region
      $region37: #{tpu_custom_call.1} parent=5 // pred_check
        _
      $region38: #{tpu_custom_call.1} parent=5 // pred_check_branch
        %228 = sbr.rel (%p225) target = $region40
      $region39: #{tpu_custom_call.1} parent=5 // pred_region
        %s229 = ssub.s32 %s18, 1
        %s230 = sand.u32 %s31, 1
        %s231 = scalar_lea.sflag [#allocation3], %s230
        %s232 = sand.u32 %s31, 1
        %s233 = smul.addr %s232, 8
        %s234 = scalar_lea.vmem [#allocation2], %s233
        // Predicated region
        $region41: #{tpu_custom_call.1} parent=39 // pred_check
          %p235 = pneg %p44
        $region42: #{tpu_custom_call.1} parent=39 // pred_check_branch
          %237 = sbr.rel (%p235) target = $region44
        $region43: #{tpu_custom_call.1} parent=39 // pred_region
          %238 = dma.done %s231, 128
        $region44: #{tpu_custom_call.1} parent=39 // pred_fallthru
          _
        // Predicated region
        $region45: #{tpu_custom_call.1} parent=39 // pred_check
          %p239 = pneg %p65
        $region46: #{tpu_custom_call.1} parent=39 // pred_check_branch
          %241 = sbr.rel (%p239) target = $region48
        $region47: #{tpu_custom_call.1} parent=39 // pred_region
          %242 = dma.done [#allocation6], 256
        $region48: #{tpu_custom_call.1} parent=39 // pred_fallthru
          _
        // Predicated region
        $region49: #{tpu_custom_call.1} parent=39 // pred_check
          %p243 = pneg %p107
        $region50: #{tpu_custom_call.1} parent=39 // pred_check_branch
          %245 = sbr.rel (%p243) target = $region52
        $region51: #{tpu_custom_call.1} parent=39 // pred_region
          %246 = dma.done [#allocation6], 1024
        $region52: #{tpu_custom_call.1} parent=39 // pred_fallthru
          _
        %s247 = sand.u32 %s31, 1
        %s248 = scalar_lea.sflag [#allocation3], %s247
        %s249 = sand.u32 %s31, 1
        %s250 = smul.addr %s249, 8
        %s251 = scalar_lea.vmem [#allocation2], %s250
        %p252 = pneg %p44
        %p253 = pneg %p41
        %p254 = pneg %p65
        %p255 = pneg %p62
        %p256 = pneg %p86
        %p257 = pneg %p83
        %p258 = pneg %p107
        %p259 = pneg %p104
        %p260 = pneg %p128
        %p261 = pneg %p125
        %p262 = pneg %p154
        %p263 = pneg %p151
        %s264 = sand.u32 %s141, 1
        %s265 = scalar_lea.sflag [#allocation4], %s264
        %s266 = sand.u32 %s141, 1
        %s267 = smul.addr %s266, 8
        %s268 = scalar_lea.vmem [#allocation8], %s267
        %v270 = vld [vmem:[%s234] sm:$0xff]
        %v271 = vld [vmem:[#allocation5] sm:$0xf]
        %v272 = vld [vmem:[#allocation5 + $0x4] sm:$0xf]
        %v273 = vld [vmem:[#allocation5 + $0x8] sm:$0xf]
        %v274 = vld [vmem:[#allocation5 + $0xc] sm:$0xf]
        %v275 = vld [vmem:[%s2] sm:$0x1]
        %v276 = vpack.c.bf16 %v270, %v270
        %v278 = vlaneseq
        %v279 = vshrl.u32 %v278, 7
        %v280 = vsub.s32 0, %v279
        %v281 = vrot.slane %v275, %v280
        %v287 = vunpack.c.l.b16 %v271
        %v288 = vunpack.c.l.b16 %v272
        %v289 = vunpack.c.l.b16 %v273
        %v290 = vunpack.c.l.b16 %v274
        %v291 = vpack.c.b16 %v288, %v287
        %v292 = vpack.c.b16 %v290, %v289
        %vm295 = vcmask 261120
        %v297 = vsel %vm295, %v276, 0
        %299 = vmatprep.subr.bf16.mxu0 0
        %300 = vmatpush1.bf16.msra.mxu0 %v291
        %301 = vmatprep.subr.bf16.mxu0 0
        %302 = vmatpush1.bf16.msra.mxu0 %v292
        %303 = vmatprep.subr.bf16.mxu0 0
        %304 = vmatpush1.bf16.msra.mxu0 0
        %305 = vmatprep.subr.bf16.mxu0 0
        %306 = vmatpush1.bf16.msra.mxu0 0
        %307 = vmatprep.subr.bf16.mxu0 0
        %308 = vmatpush1.bf16.msra.mxu0 0
        %309 = vmatprep.subr.bf16.mxu0 0
        %310 = vmatpush1.bf16.msra.mxu0 0
        %311 = vmatprep.subr.bf16.mxu0 0
        %312 = vmatpush1.bf16.msra.mxu0 0
        %313 = vmatprep.subr.bf16.mxu0 0
        %314 = vmatpush1.bf16.msra.mxu0 0
        %315 = vmatprep.subr.bf16.mxu0 0
        %316 = vmatpush1.bf16.msra.mxu0 0
        %317 = vmatprep.subr.bf16.mxu0 0
        %318 = vmatpush1.bf16.msra.mxu0 0
        %319 = vmatprep.subr.bf16.mxu0 0
        %320 = vmatpush1.bf16.msra.mxu0 0
        %321 = vmatprep.subr.bf16.mxu0 0
        %322 = vmatpush1.bf16.msra.mxu0 0
        %323 = vmatprep.subr.bf16.mxu0 0
        %324 = vmatpush1.bf16.msra.mxu0 0
        %325 = vmatprep.subr.bf16.mxu0 0
        %326 = vmatpush1.bf16.msra.mxu0 0
        %327 = vmatprep.subr.bf16.mxu0 0
        %328 = vmatpush1.bf16.msra.mxu0 0
        %329 = vmatprep.subr.bf16.mxu0 0
        %330 = vmatpush1.bf16.msra.mxu0 0
        %331 = vmatprep.mubr.bf16.mxu0 0
        %332 = vmatmul.mubr.bf16.gmra.mrb[0].mxu0 %v297
        %v333 = vpop.f32.mrb[0].mxu0
        %v334 = vadd.f32 %v281, %v333
        %v335 = vpop.f32.mrb[0].mxu0
        %v336 = vpop.f32.mrb[0].mxu0
        %v337 = vpop.f32.mrb[0].mxu0
        %338 = vdwg.mxu0
        %v339 = vtanh.pop %v334
        %v340 = vld [vmem:[#allocation7] sm:$0xf]
        %v341 = vld [vmem:[#allocation7 + $0x4] sm:$0xf]
        %v342 = vld [vmem:[#allocation7 + $0x8] sm:$0xf]
        %v343 = vld [vmem:[#allocation7 + $0xc] sm:$0xf]
        %v344 = vld [vmem:[#allocation7 + $0x10] sm:$0xf]
        %v345 = vld [vmem:[#allocation7 + $0x14] sm:$0xf]
        %v346 = vld [vmem:[#allocation7 + $0x18] sm:$0xf]
        %v347 = vld [vmem:[#allocation7 + $0x1c] sm:$0xf]
        %v348 = vld [vmem:[#allocation7 + $0x20] sm:$0xf]
        %v349 = vld [vmem:[#allocation7 + $0x24] sm:$0xf]
        %v350 = vld [vmem:[#allocation7 + $0x28] sm:$0xf]
        %v351 = vld [vmem:[#allocation7 + $0x2c] sm:$0xf]
        %v352 = vld [vmem:[#allocation7 + $0x30] sm:$0xf]
        %v353 = vld [vmem:[#allocation7 + $0x34] sm:$0xf]
        %v354 = vld [vmem:[#allocation7 + $0x38] sm:$0xf]
        %v355 = vld [vmem:[#allocation7 + $0x3c] sm:$0xf]
        %v356 = vld [vmem:[%s4] sm:$0x1]
        %v357 = vpack.c.bf16 %v339, %v339
        %v359 = vlaneseq
        %v360 = vshrl.u32 %v359, 7
        %v361 = vsub.s32 0, %v360
        %v362 = vrot.slane %v356, %v361
        %v380 = vunpack.c.l.b16 %v340
        %v381 = vunpack.c.l.b16 %v341
        %v382 = vunpack.c.l.b16 %v342
        %v383 = vunpack.c.l.b16 %v343
        %v384 = vunpack.c.l.b16 %v344
        %v385 = vunpack.c.l.b16 %v345
        %v386 = vunpack.c.l.b16 %v346
        %v387 = vunpack.c.l.b16 %v347
        %v388 = vunpack.c.l.b16 %v348
        %v389 = vunpack.c.l.b16 %v349
        %v390 = vunpack.c.l.b16 %v350
        %v391 = vunpack.c.l.b16 %v351
        %v392 = vunpack.c.l.b16 %v352
        %v393 = vunpack.c.l.b16 %v353
        %v394 = vunpack.c.l.b16 %v354
        %v395 = vunpack.c.l.b16 %v355
        %v396 = vpack.c.b16 %v381, %v380
        %v397 = vpack.c.b16 %v383, %v382
        %v398 = vpack.c.b16 %v385, %v384
        %v399 = vpack.c.b16 %v387, %v386
        %v400 = vpack.c.b16 %v389, %v388
        %v401 = vpack.c.b16 %v391, %v390
        %v402 = vpack.c.b16 %v393, %v392
        %v403 = vpack.c.b16 %v395, %v394
        %412 = vmatprep.subr.bf16.mxu0 0
        %413 = vmatpush1.bf16.msra.mxu0 %v396
        %414 = vmatprep.subr.bf16.mxu0 0
        %415 = vmatpush1.bf16.msra.mxu0 %v397
        %416 = vmatprep.subr.bf16.mxu0 0
        %417 = vmatpush1.bf16.msra.mxu0 %v398
        %418 = vmatprep.subr.bf16.mxu0 0
        %419 = vmatpush1.bf16.msra.mxu0 %v399
        %420 = vmatprep.subr.bf16.mxu0 0
        %421 = vmatpush1.bf16.msra.mxu0 %v400
        %422 = vmatprep.subr.bf16.mxu0 0
        %423 = vmatpush1.bf16.msra.mxu0 %v401
        %424 = vmatprep.subr.bf16.mxu0 0
        %425 = vmatpush1.bf16.msra.mxu0 %v402
        %426 = vmatprep.subr.bf16.mxu0 0
        %427 = vmatpush1.bf16.msra.mxu0 %v403
        %428 = vmatprep.subr.bf16.mxu0 0
        %429 = vmatpush1.bf16.msra.mxu0 0
        %430 = vmatprep.subr.bf16.mxu0 0
        %431 = vmatpush1.bf16.msra.mxu0 0
        %432 = vmatprep.subr.bf16.mxu0 0
        %433 = vmatpush1.bf16.msra.mxu0 0
        %434 = vmatprep.subr.bf16.mxu0 0
        %435 = vmatpush1.bf16.msra.mxu0 0
        %436 = vmatprep.subr.bf16.mxu0 0
        %437 = vmatpush1.bf16.msra.mxu0 0
        %438 = vmatprep.subr.bf16.mxu0 0
        %439 = vmatpush1.bf16.msra.mxu0 0
        %440 = vmatprep.subr.bf16.mxu0 0
        %441 = vmatpush1.bf16.msra.mxu0 0
        %442 = vmatprep.subr.bf16.mxu0 0
        %443 = vmatpush1.bf16.msra.mxu0 0
        %444 = vmatprep.mubr.bf16.mxu0 0
        %445 = vmatmul.mubr.bf16.gmra.mrb[0].mxu0 %v357
        %v446 = vpop.f32.mrb[0].mxu0
        %v447 = vadd.f32 %v362, %v446
        %v448 = vpop.f32.mrb[0].mxu0
        %v449 = vpop.f32.mrb[0].mxu0
        %v450 = vpop.f32.mrb[0].mxu0
        %451 = vdwg.mxu0
        %452 = vst [vmem:[%s268] sm:$0xff] %v447
        %s453 = sand.u32 %s141, 1
        %s454 = scalar_lea.sflag [#allocation4], %s453
        %s455 = sand.u32 %s141, 1
        %s456 = smul.addr %s455, 8
        %s457 = scalar_lea.vmem [#allocation8], %s456
        // Predicated region
        $region53: #{tpu_custom_call.1} parent=39 // pred_check
          %p458 = pneg %p151
        $region54: #{tpu_custom_call.1} parent=39 // pred_check_branch
          %460 = sbr.rel (%p458) target = $region56
        $region55: #{tpu_custom_call.1} parent=39 // pred_region
          %s462 = ssub.s32 128, 128
          %463 = vsyncadd %s454, %s462
          %s464 = smul.addr %s23, 128
          %s465 = scalar_lea.hbm %s5, %s464
          %s467 = sshll.u32 %s457, 4
          %s468 = int_to_ptr.vmem [resolvable:$true] %s467
          %470 = dma.vmem_to_hbm [thread:$0]  %s468, 128, %s465, %s454
        $region56: #{tpu_custom_call.1} parent=39 // pred_fallthru
          _
      $region40: #{tpu_custom_call.1} parent=5 // pred_fallthru
        _
      %p471 = scmp.le.s32.totalorder 2, %s18
      // Predicated region
      $region57: #{tpu_custom_call.1} parent=5 // pred_check
        %p472 = pneg %p471
      $region58: #{tpu_custom_call.1} parent=5 // pred_check_branch
        %474 = sbr.rel (%p472) target = $region60
      $region59: #{tpu_custom_call.1} parent=5 // pred_region
        %s475 = ssub.s32 %s18, 2
        // Predicated region
        $region61: #{tpu_custom_call.1} parent=59 // pred_check
          %p476 = pneg %p157
        $region62: #{tpu_custom_call.1} parent=59 // pred_check_branch
          %478 = sbr.rel (%p476) target = $region64
        $region63: #{tpu_custom_call.1} parent=59 // pred_region
          %s479 = sand.u32 %s142, 1
          %s480 = scalar_lea.sflag [#allocation4], %s479
          %s481 = sand.u32 %s142, 1
          %s482 = smul.addr %s481, 8
          %s483 = scalar_lea.vmem [#allocation8], %s482
          %484 = dma.done %s480, 128
        $region64: #{tpu_custom_call.1} parent=59 // pred_fallthru
          _
      $region60: #{tpu_custom_call.1} parent=5 // pred_fallthru
        _
    $region6: #{tpu_custom_call.1} parent=1 // loop_footer
      %s22 = sadd.s32 1, %s18
    $region7: #{tpu_custom_call.1} parent=1 // loop_footer_branch
      %17 = sbr.rel target = $region3
    $region8: #{tpu_custom_call.1} parent=1 // loop_exit
      _
    %485 = vsyncpa [#allocation3], 1
    %s486 = scalar_lea.sflag [#allocation3], 1
    %487 = vsyncpa %s486, 1
    %488 = vsyncpa [#allocation6], 1
    %489 = vsyncpa [#allocation4], 1
    %s490 = scalar_lea.sflag [#allocation4], 1
    %491 = vsyncpa %s490, 1

</llo_original>
